<compile_context>
chip_gen: v5e
topology: v5e:2x2
jax: 0.10.0
libtpu: 0.0.40
codegen_flags: <defaults>
</compile_context>

<pallas_src>
import functools

import jax
import jax.numpy as jnp
from jax.experimental import pallas as pl
from jax.experimental.pallas import tpu as pltpu


def ea_head_kernel(x_ref, wkk_ref, wv_ref, o_ref, *, n_valid):
    # x_ref:   (bt, c, n_pad)  input block (also the residual)
    # wkk_ref: (k, c)          fused Wk @ W1
    # wv_ref:  (c, k)          v_linear weight
    # o_ref:   (bt, c, n_pad)  output block
    bt, _, n_pad = x_ref.shape

    wkk = wkk_ref[...]                                    # (k, c), native dtype
    wv = wv_ref[...]                                      # (c, k), native dtype

    @pl.loop(0, bt)                                       # bounds temp live-ranges
    def _(bi):
        xb = x_ref[bi]                                    # (c, n_pad)

        # fused first_conv + k_linear: (k,c)@(c,n), f32 accumulate on the MXU.
        logits = jnp.dot(wkk, xb, preferred_element_type=jnp.float32)  # (k, n)

        if n_valid < n_pad:                               # static: only when padded
            col = jax.lax.broadcasted_iota(jnp.int32, logits.shape, 1)
            logits = jnp.where(col < n_valid, logits, -jnp.inf)

        # softmax over the spatial axis (lanes); EUP approx reciprocal.
        logits = logits - jnp.max(logits, axis=-1, keepdims=True)
        attn = jnp.exp(logits)
        attn = attn * pl.reciprocal(
            jnp.sum(attn, axis=-1, keepdims=True), approx=True)

        # double-normalization over the k axis (sublanes); exact divide.
        attn = attn / (jnp.sum(attn, axis=0, keepdims=True) + 1e-9)

        # v_linear + residual with the ORIGINAL input.
        out = jnp.dot(wv, attn.astype(wv.dtype),
                      preferred_element_type=jnp.float32)               # (c, n)
        o_ref[bi] = (out + xb.astype(jnp.float32)).astype(o_ref.dtype)


def ea_head_forward(x_nchw, w1, b1, wk, wv, *, batch_tile=1, io_dtype=None):
    """EAHead forward pass.

    x_nchw: (b, c, h, w); w1: (c, c); b1: (c,); wk: (k, c); wv: (c, k).
    io_dtype: optional dtype (e.g. jnp.bfloat16) for HBM-facing tensors;
              softmax / accumulation math stays f32 regardless.
    """
    b, c, h, w = x_nchw.shape
    n = h * w
    k = wk.shape[0]

    # ---- host-side algebraic fusion of first_conv into k_linear -------------
    # bk = Wk @ b1 is cancelled exactly by the softmax max-subtraction
    # (per-k-row constant along the softmax axis) and is therefore not computed.
    wkk = jnp.dot(wk.astype(jnp.float32), w1.astype(jnp.float32))        # (k, c)

    dtype = jnp.dtype(io_dtype) if io_dtype is not None else jnp.dtype(x_nchw.dtype)
    x = x_nchw.reshape(b, c, n).astype(dtype)
    wkk = wkk.astype(dtype)
    wv_d = wv.astype(dtype)

    # ---- pad the lane axis to a multiple of 128 (dense, unmasked stores) ----
    n_pad = ((n + 127) // 128) * 128
    if n_pad != n:
        x = jnp.pad(x, ((0, 0), (0, 0), (0, n_pad - n)))

    assert b % batch_tile == 0, "batch must be divisible by batch_tile"
    grid = (b // batch_tile,)
    # v7x note: keep (b // batch_tile) even so both TensorCores stay busy.

    # ---- VMEM budget: in+out double-buffered blocks + weights + f32 temps ---
    dt_bytes = dtype.itemsize
    block_bytes = batch_tile * c * n_pad * dt_bytes        # one buffer of x / out
    weight_bytes = 2 * k * c * dt_bytes                    # Wkk + Wv
    temp_bytes = (c * n_pad + 2 * k * n_pad) * 4           # f32 temps, one item live
    est = 4 * block_bytes + 2 * weight_bytes + temp_bytes
    vmem_limit = int(min(max(est * 3 // 2, 32 << 20), 64 << 20))

    out = pl.pallas_call(
        functools.partial(ea_head_kernel, n_valid=n),
        out_shape=jax.ShapeDtypeStruct((b, c, n_pad), dtype),
        grid_spec=pltpu.PrefetchScalarGridSpec(
            num_scalar_prefetch=0,
            grid=grid,
            in_specs=[
                pl.BlockSpec((batch_tile, c, n_pad), lambda i: (i, 0, 0)),  # x
                pl.BlockSpec((k, c), lambda i: (0, 0)),                     # Wkk
                pl.BlockSpec((c, k), lambda i: (0, 0)),                     # Wv
            ],
            out_specs=pl.BlockSpec((batch_tile, c, n_pad), lambda i: (i, 0, 0)),
        ),
        compiler_params=pltpu.CompilerParams(
            dimension_semantics=("parallel",),
            vmem_limit_bytes=vmem_limit,
        ),
    )(x, wkk, wv_d)

    if n_pad != n:
        out = out[:, :, :n]
    return out.reshape(b, c, h, w)


def ea_head_reference(x_nchw, w1, b1, wk, wv):
    """Pure-JAX reference mirroring the PyTorch forward (un-fused, f32, with bias)."""
    b, c, h, w = x_nchw.shape
    x = x_nchw.reshape(b, c, h * w).astype(jnp.float32)
    y = jnp.einsum("oc,bcn->bon", w1.astype(jnp.float32), x) \
        + b1.astype(jnp.float32)[None, :, None]
    attn = jnp.einsum("kc,bcn->bkn", wk.astype(jnp.float32), y)
    attn = jax.nn.softmax(attn, axis=-1)
    attn = attn / (jnp.sum(attn, axis=1, keepdims=True) + 1e-9)
    out = jnp.einsum("ck,bkn->bcn", wv.astype(jnp.float32), attn) + x
    return out.reshape(b, c, h, w).astype(x_nchw.dtype)


if __name__ == "__main__":
    B, C, H, W = 2, 4, 16, 16
    K = 32  # self.k in the module

    key = jax.random.PRNGKey(0)
    kx, k1, kb, kk, kv = jax.random.split(key, 5)

    x = jax.random.normal(kx, (B, C, H, W), dtype=jnp.float32)
    # Conv2d(c, c, 1):  weight (c, c, 1, 1) -> (c, c); bias (c,)
    w1 = jax.random.normal(k1, (C, C), dtype=jnp.float32) * 0.1
    b1 = jax.random.normal(kb, (C,), dtype=jnp.float32) * 0.1
    # Conv1d(c, k, 1, bias=False): weight (k, c, 1) -> (k, c)
    wk = jax.random.normal(kk, (K, C), dtype=jnp.float32) * 0.1
    # Conv1d(k, c, 1, bias=False): weight (c, k, 1) -> (c, k)
    wv = jax.random.normal(kv, (C, K), dtype=jnp.float32) * 0.1

    out = jax.block_until_ready(ea_head_forward(x, w1, b1, wk, wv))
    ref = ea_head_reference(x, w1, b1, wk, wv)

    assert out.shape == (B, C, H, W)
    # Tolerance covers the host-side Wk@W1 fusion (different f32 associativity)
    # and the approximate (EUP) reciprocal in the softmax denominator.
    assert jnp.allclose(out, ref, atol=2e-3, rtol=2e-3), "mismatch vs reference"

    print("KERNEL_OK")
</pallas_src>

<mosaic_0001>
module attributes {stable_mosaic.version = 11 : i64} {
  func.func @ea_head_kernel(%arg0: i32, %arg1: memref<1x4x256xf32, #tpu.memory_space<vmem>>, %arg2: memref<32x4xf32, #tpu.memory_space<vmem>>, %arg3: memref<4x32xf32, #tpu.memory_space<vmem>>, %arg4: memref<1x4x256xf32, #tpu.memory_space<vmem>>) attributes {dimension_semantics = [#tpu.dimension_semantics<parallel>], iteration_bounds = array<i64: 2>, scalar_prefetch = 0 : i64, scratch_operands = 0 : i64, tpu.core_type = #tpu.core_type<tc>, window_params = [{transform_indices = @transform_0, window_bounds = array<i64: 1, 4, 256>}, {pipeline_mode = #tpu.pipeline_mode<synchronous>, transform_indices = @transform_1, window_bounds = array<i64: 32, 4>}, {pipeline_mode = #tpu.pipeline_mode<synchronous>, transform_indices = @transform_2, window_bounds = array<i64: 4, 32>}, {transform_indices = @transform_3, window_bounds = array<i64: 1, 4, 256>}]} {
    %c0 = arith.constant 0 : index
    %c0_0 = arith.constant 0 : index
    %0 = vector.load %arg2[%c0, %c0_0] : memref<32x4xf32, #tpu.memory_space<vmem>>, vector<32x4xf32>
    %c0_1 = arith.constant 0 : index
    %c0_2 = arith.constant 0 : index
    %1 = vector.load %arg3[%c0_1, %c0_2] : memref<4x32xf32, #tpu.memory_space<vmem>>, vector<4x32xf32>
    %c0_i32 = arith.constant 0 : i32
    %c1_i32 = arith.constant 1 : i32
    %2 = arith.muli %c0_i32, %c1_i32 : i32
    %c0_i32_3 = arith.constant 0 : i32
    %3 = arith.addi %c0_i32_3, %2 : i32
    %4 = arith.index_cast %3 : i32 to index
    %c0_4 = arith.constant 0 : index
    %c0_5 = arith.constant 0 : index
    %5 = vector.load %arg1[%4, %c0_4, %c0_5] : memref<1x4x256xf32, #tpu.memory_space<vmem>>, vector<1x4x256xf32>
    %6 = vector.shape_cast %5 : vector<1x4x256xf32> to vector<4x256xf32>
    %cst = arith.constant dense<0.000000e+00> : vector<32x256xf32>
    %7 = tpu.matmul %0, %6, %cst {dimension_numbers = #tpu.dot_dimension_numbers<[1], [0], [0], [1], [0, 0, 1, 1], [], []>} : vector<32x4xf32>, vector<4x256xf32>, vector<32x256xf32> -> vector<32x256xf32>
    %cst_6 = arith.constant dense<0xFF800000> : vector<32xf32>
    %8 = vector.multi_reduction <maximumf>, %7, %cst_6 [1] : vector<32x256xf32> to vector<32xf32>
    %9 = vector.shape_cast %8 : vector<32xf32> to vector<32x1xf32>
    %10 = vector.broadcast %9 : vector<32x1xf32> to vector<32x256xf32>
    %11 = arith.subf %7, %10 : vector<32x256xf32>
    %12 = math.exp %11 : vector<32x256xf32>
    %cst_7 = arith.constant dense<0.000000e+00> : vector<32xf32>
    %13 = vector.multi_reduction <add>, %12, %cst_7 [1] : vector<32x256xf32> to vector<32xf32>
    %14 = vector.shape_cast %13 : vector<32xf32> to vector<32x1xf32>
    %15 = tpu.reciprocal %14 {approx = true} : vector<32x1xf32> -> vector<32x1xf32>
    %16 = vector.broadcast %15 : vector<32x1xf32> to vector<32x256xf32>
    %17 = arith.mulf %12, %16 : vector<32x256xf32>
    %cst_8 = arith.constant dense<0.000000e+00> : vector<256xf32>
    %18 = vector.multi_reduction <add>, %17, %cst_8 [0] : vector<32x256xf32> to vector<256xf32>
    %19 = vector.shape_cast %18 : vector<256xf32> to vector<1x256xf32>
    %cst_9 = arith.constant 9.99999971E-10 : f32
    %20 = vector.broadcast %cst_9 : f32 to vector<1x256xf32>
    %21 = arith.addf %19, %20 : vector<1x256xf32>
    %22 = vector.broadcast %21 : vector<1x256xf32> to vector<32x256xf32>
    %23 = arith.divf %17, %22 : vector<32x256xf32>
    %cst_10 = arith.constant dense<0.000000e+00> : vector<4x256xf32>
    %24 = tpu.matmul %1, %23, %cst_10 {dimension_numbers = #tpu.dot_dimension_numbers<[1], [0], [0], [1], [0, 0, 1, 1], [], []>} : vector<4x32xf32>, vector<32x256xf32>, vector<4x256xf32> -> vector<4x256xf32>
    %25 = arith.addf %24, %6 : vector<4x256xf32>
    %26 = arith.index_cast %3 : i32 to index
    %c0_11 = arith.constant 0 : index
    %c0_12 = arith.constant 0 : index
    %27 = vector.load %arg4[%26, %c0_11, %c0_12] : memref<1x4x256xf32, #tpu.memory_space<vmem>>, vector<1x4x256xf32>
    %28 = vector.shape_cast %27 : vector<1x4x256xf32> to vector<4x256xf32>
    %29 = vector.shape_cast %25 : vector<4x256xf32> to vector<1x4x256xf32>
    tpu.vector_store %arg4[%26, %c0_11, %c0_12], %29 {strides = array<i32>} : memref<1x4x256xf32, #tpu.memory_space<vmem>>, vector<1x4x256xf32>,
    %c1_i32_13 = arith.constant 1 : i32
    return
  }
  func.func @transform_0(%arg0: i32) -> (i32, i32, i32) {
    %c0_i32 = arith.constant 0 : i32
    %c0_i32_0 = arith.constant 0 : i32
    %c0_i32_1 = arith.constant 0 : i32
    return %arg0, %c0_i32, %c0_i32_0 : i32, i32, i32
  }
  func.func @transform_1(%arg0: i32) -> (i32, i32) {
    %c0_i32 = arith.constant 0 : i32
    %c0_i32_0 = arith.constant 0 : i32
    %c0_i32_1 = arith.constant 0 : i32
    return %c0_i32, %c0_i32_0 : i32, i32
  }
  func.func @transform_2(%arg0: i32) -> (i32, i32) {
    %c0_i32 = arith.constant 0 : i32
    %c0_i32_0 = arith.constant 0 : i32
    %c0_i32_1 = arith.constant 0 : i32
    return %c0_i32, %c0_i32_0 : i32, i32
  }
  func.func @transform_3(%arg0: i32) -> (i32, i32, i32) {
    %c0_i32 = arith.constant 0 : i32
    %c0_i32_0 = arith.constant 0 : i32
    %c0_i32_1 = arith.constant 0 : i32
    return %arg0, %c0_i32, %c0_i32_0 : i32, i32, i32
  }
}

</mosaic_0001>

<llo_original>
// kernel: tpu_custom_call.1
$region0: #{tpu_custom_call.1}
  #allocation0 [shape = 'u32[]', space=smem, size = 0x4, offset = 0x4, fixed_abs, tag = 'smem constant byte address 0x4 - core index']
  #allocation1 [shape = 'u32[72,128]{1,0:T(1,128)}', space=vmem, size = 0x9000, scoped, tag = 'internal scratch']
  %s0 = inlined_call_operand.vmem [shape: f32[2,4,256], index: 0, kind: input, shape index: {}]
  %s1 = inlined_call_operand.vmem [shape: f32[32,4], index: 1, kind: input, shape index: {}]
  %s2 = inlined_call_operand.vmem [shape: f32[4,32], index: 2, kind: input, shape index: {}]
  %s3 = inlined_call_operand.hbm [shape: f32[2,4,256], index: 3, kind: output, shape index: {}]
  %s4 = sld [smem:[#allocation0]]
  $region45: #{tpu_custom_call.1} parent=0
    _
  %s6 = ssub.s32 1, %s4
  %s7 = scalar_select 0, %s6, %s4
  $region1: #{tpu_custom_call.1} parent=0
    #allocation2 [shape = 'u8[8192]{0}', space=vmem, size = 0x2000, scoped, tag = 'output window, operand 0']
    #allocation3 [shape = 's32[2]{0}', space=sflag, size = 0x8, scoped, tag = 'scoped memory for tpu_custom_call.1']
    %8 = vsyncpa [#allocation3], 0
    %s9 = scalar_lea.sflag [#allocation3], 1
    %10 = vsyncpa %s9, 0
    loop: start=0, step=1, limit=4
    $region2: #{tpu_custom_call.1} parent=1 // loop_pre_header
      _
    $region3: #{tpu_custom_call.1} parent=1 // loop_header
      %s12 = sphi 0, %s16
      %p13 = scmp.ge.s32.totalorder %s12, 4
      %s22 = sphi 0, %s24
      %s25 = sphi 0, %s22
      %s26 = sphi 0, %s25
      %s42 = sphi 0, %s26
      %s46 = sphi 0, %s46
      %s48 = sphi 0, %s46
      %s49 = sphi 0, %s48
      %s63 = sphi 0, %s49
      %s67 = sphi 0, %s67
      %s69 = sphi 0, %s67
      %s70 = sphi 0, %s69
      %s84 = sphi 0, %s70
      %s90 = sphi 0, %s92
      %s93 = sphi 0, %s90
      %s94 = sphi 0, %s93
      %s110 = sphi 0, %s94
    $region4: #{tpu_custom_call.1} parent=1 // loop_header_branch
      %15 = sbr.rel (%p13) target = $region8
    $region5: #{tpu_custom_call.1} parent=1 // loop_body
      %s17 = ssub.s32 %s12, 1
      %s18 = ssub.s32 %s12, 2
      %s19 = sadd.s32 %s12, 1
      %s20 = ssub.s32 %s12, %s19
      %p21 = scmp.eq.s32.totalorder %s20, 0
      %s23 = sadd.s32 %s22, 1
      %s24 = scalar_select %p21, %s22, %s23
      %p27 = pneg %p21
      %p28 = scmp.eq.s32.totalorder %s12, 1
      %p29 = por %p27, %p28
      %p30 = scmp.ne.s32.totalorder %s22, %s25
      %p31 = scmp.eq.s32.totalorder %s12, 0
      %p32 = por %p30, %p31
      %p33 = scmp.ne.s32.totalorder %s22, %s25
      %p34 = scmp.eq.s32.totalorder %s17, 1
      %p35 = por %p33, %p34
      %p36 = scmp.ne.s32.totalorder %s25, %s26
      %p37 = scmp.eq.s32.totalorder %s17, 0
      %p38 = por %p36, %p37
      %p39 = scmp.ne.s32.totalorder %s25, %s26
      %p40 = scmp.eq.s32.totalorder %s18, 1
      %p41 = por %p39, %p40
      %p43 = scmp.ne.s32.totalorder %s26, %s42
      %p44 = scmp.eq.s32.totalorder %s18, 0
      %p45 = por %p43, %p44
      %s47 = sadd.s32 %s46, 1
      %p50 = scmp.eq.s32.totalorder %s12, 1
      %p51 = scmp.ne.s32.totalorder %s46, %s48
      %p52 = scmp.eq.s32.totalorder %s12, 0
      %p53 = por %p51, %p52
      %p54 = scmp.ne.s32.totalorder %s46, %s48
      %p55 = scmp.eq.s32.totalorder %s17, 1
      %p56 = por %p54, %p55
      %p57 = scmp.ne.s32.totalorder %s48, %s49
      %p58 = scmp.eq.s32.totalorder %s17, 0
      %p59 = por %p57, %p58
      %p60 = scmp.ne.s32.totalorder %s48, %s49
      %p61 = scmp.eq.s32.totalorder %s18, 1
      %p62 = por %p60, %p61
      %p64 = scmp.ne.s32.totalorder %s49, %s63
      %p65 = scmp.eq.s32.totalorder %s18, 0
      %p66 = por %p64, %p65
      %s68 = sadd.s32 %s67, 1
      %p71 = scmp.eq.s32.totalorder %s12, 1
      %p72 = scmp.ne.s32.totalorder %s67, %s69
      %p73 = scmp.eq.s32.totalorder %s12, 0
      %p74 = por %p72, %p73
      %p75 = scmp.ne.s32.totalorder %s67, %s69
      %p76 = scmp.eq.s32.totalorder %s17, 1
      %p77 = por %p75, %p76
      %p78 = scmp.ne.s32.totalorder %s69, %s70
      %p79 = scmp.eq.s32.totalorder %s17, 0
      %p80 = por %p78, %p79
      %p81 = scmp.ne.s32.totalorder %s69, %s70
      %p82 = scmp.eq.s32.totalorder %s18, 1
      %p83 = por %p81, %p82
      %p85 = scmp.ne.s32.totalorder %s70, %s84
      %p86 = scmp.eq.s32.totalorder %s18, 0
      %p87 = por %p85, %p86
      %s88 = ssub.s32 %s12, %s19
      %p89 = scmp.eq.s32.totalorder %s88, 0
      %s91 = sadd.s32 %s90, 1
      %s92 = scalar_select %p89, %s90, %s91
      %p95 = pneg %p89
      %p96 = scmp.eq.s32.totalorder %s12, 1
      %p97 = por %p95, %p96
      %p98 = scmp.ne.s32.totalorder %s90, %s93
      %p99 = scmp.eq.s32.totalorder %s12, 0
      %p100 = por %p98, %p99
      %p101 = scmp.ne.s32.totalorder %s90, %s93
      %p102 = scmp.eq.s32.totalorder %s17, 1
      %p103 = por %p101, %p102
      %p104 = scmp.ne.s32.totalorder %s93, %s94
      %p105 = scmp.eq.s32.totalorder %s17, 0
      %p106 = por %p104, %p105
      %p107 = scmp.ne.s32.totalorder %s93, %s94
      %p108 = scmp.eq.s32.totalorder %s18, 1
      %p109 = por %p107, %p108
      %p111 = scmp.ne.s32.totalorder %s94, %s110
      %p112 = scmp.eq.s32.totalorder %s18, 0
      %p113 = por %p111, %p112
      %p114 = scmp.le.s32.totalorder 1, %s12
      %p115 = scmp.lt.s32.totalorder %s12, 3
      %p116 = pnand %p114, %p115
      %p117 = pneg %p116
      // Predicated region
      $region9: #{tpu_custom_call.1} parent=5 // pred_check
        _
      $region10: #{tpu_custom_call.1} parent=5 // pred_check_branch
        %119 = sbr.rel (%p116) target = $region12
      $region11: #{tpu_custom_call.1} parent=5 // pred_region
        %s120 = ssub.s32 %s12, 1
        // Predicated region
        $region13: #{tpu_custom_call.1} parent=11 // pred_check
          %p121 = pneg %p59
        $region14: #{tpu_custom_call.1} parent=11 // pred_check_branch
          %123 = sbr.rel (%p121) target = $region16
        $region15: #{tpu_custom_call.1} parent=11 // pred_region
          _
        $region16: #{tpu_custom_call.1} parent=11 // pred_fallthru
          _
        // Predicated region
        $region17: #{tpu_custom_call.1} parent=11 // pred_check
          %p124 = pneg %p80
        $region18: #{tpu_custom_call.1} parent=11 // pred_check_branch
          %126 = sbr.rel (%p124) target = $region20
        $region19: #{tpu_custom_call.1} parent=11 // pred_region
          _
        $region20: #{tpu_custom_call.1} parent=11 // pred_fallthru
          _
      $region12: #{tpu_custom_call.1} parent=5 // pred_fallthru
        _
      %p127 = scmp.lt.s32.totalorder %s12, 2
      // Predicated region
      $region21: #{tpu_custom_call.1} parent=5 // pred_check
        %p128 = pneg %p127
      $region22: #{tpu_custom_call.1} parent=5 // pred_check_branch
        %130 = sbr.rel (%p128) target = $region24
      $region23: #{tpu_custom_call.1} parent=5 // pred_region
        // Predicated region
        $region25: #{tpu_custom_call.1} parent=23 // pred_check
          %p131 = pneg %p32
        $region26: #{tpu_custom_call.1} parent=23 // pred_check_branch
          %133 = sbr.rel (%p131) target = $region28
        $region27: #{tpu_custom_call.1} parent=23 // pred_region
          %p134 = scmp.lt.s32.totalorder %s12, 1
          %s135 = scalar_select %p134, %s12, 1
          %s136 = smul.addr %s135, 2
          %s137 = smul.addr %s136, 4
          %s138 = scalar_lea.vmem %s0, %s137
        $region28: #{tpu_custom_call.1} parent=23 // pred_fallthru
          _
      $region24: #{tpu_custom_call.1} parent=5 // pred_fallthru
        _
      %p139 = scmp.le.s32.totalorder 1, %s12
      %p140 = scmp.lt.s32.totalorder %s12, 3
      %p141 = pnand %p139, %p140
      %p142 = pneg %p141
      // Predicated region
      $region29: #{tpu_custom_call.1} parent=5 // pred_check
        _
      $region30: #{tpu_custom_call.1} parent=5 // pred_check_branch
        %144 = sbr.rel (%p141) target = $region32
      $region31: #{tpu_custom_call.1} parent=5 // pred_region
        %s145 = ssub.s32 %s12, 1
        %p146 = scmp.lt.s32.totalorder %s17, 1
        %s147 = scalar_select %p146, %s17, 1
        %s148 = smul.addr %s147, 2
        %s149 = smul.addr %s148, 4
        %s150 = scalar_lea.vmem %s0, %s149
        %p151 = pneg %p38
        %p152 = pneg %p35
        %p153 = pneg %p59
        %p154 = pneg %p56
        %p155 = pneg %p80
        %p156 = pneg %p77
        %p157 = pneg %p106
        %p158 = pneg %p103
        %s159 = sand.u32 %s93, 1
        %s160 = scalar_lea.sflag [#allocation3], %s159
        %s161 = sand.u32 %s93, 1
        %s162 = smul.addr %s161, 8
        %s163 = scalar_lea.vmem [#allocation2], %s162
        %p164 = scmp.lt.s32.totalorder %s17, 1
        %s165 = scalar_select %p164, %s17, 1
        %s166 = smul.addr %s165, 2
        %s167 = smul.addr %s166, 4
        %s168 = scalar_lea.vmem %s0, %s167
        %v169 = vld [vmem:[%s1] sm:$0xff]
        %v170 = vld [vmem:[%s1 + $0x8] sm:$0xff]
        %v171 = vld [vmem:[%s1 + $0x10] sm:$0xff]
        %v172 = vld [vmem:[%s1 + $0x18] sm:$0xff]
        %v173 = vld [vmem:[%s2] sm:$0xf]
        %v174 = vld [vmem:[%s168] sm:$0xff]
        %176 = vst [vmem:[#allocation1] ss:$2 sm:$0xff] %v174
        %v177 = vld.sshfl [vmem:[#allocation1] sm:$0xff pattern:$0x75316420]
        %v178 = vld.sshfl [vmem:[#allocation1 + $0x8] sm:$0xff pattern:$0x75316420]
        %vm179 = vcmask 31744
        %v181 = vsel %vm179, %v169, 0
        %v184 = vsel %vm179, %v170, 0
        %v187 = vsel %vm179, %v171, 0
        %v190 = vsel %vm179, %v172, 0
        %vm192 = vcmask 1043456
        %v193 = vsel %vm192, %v177, 0
        %v195 = vsel %vm192, %v178, 0
        %197 = vmatpush.msra.mxu0 0.0
        %198 = vmatpush.msra.mxu0 0.0
        %199 = vmatpush.msra.mxu0 0.0
        %200 = vmatpush.msra.mxu0 0.0
        %201 = vmatpush.msra.mxu0 0.0
        %202 = vmatpush.msra.mxu0 0.0
        %203 = vmatpush.msra.mxu0 0.0
        %204 = vmatpush.msra.mxu0 0.0
        %205 = vmatpush.msra.mxu0 0.0
        %206 = vmatpush.msra.mxu0 0.0
        %207 = vmatpush.msra.mxu0 0.0
        %208 = vmatpush.msra.mxu0 0.0
        %209 = vmatpush.msra.mxu0 0.0
        %210 = vmatpush.msra.mxu0 0.0
        %211 = vmatpush.msra.mxu0 0.0
        %212 = vmatpush.msra.mxu0 %v193
        %213 = vmatmul.f32.gmra.mxu0 %v181
        %v214 = vpop.f32.mrf.mxu0
        %v215 = vadd.f32 0.0, %v214
        %216 = vmatmul.f32.gmra.mxu0 %v184
        %v217 = vpop.f32.mrf.mxu0
        %v218 = vadd.f32 0.0, %v217
        %219 = vmatmul.f32.gmra.mxu0 %v187
        %v220 = vpop.f32.mrf.mxu0
        %v221 = vadd.f32 0.0, %v220
        %222 = vmatmul.f32.gmra.mxu0 %v190
        %v223 = vpop.f32.mrf.mxu0
        %v224 = vadd.f32 0.0, %v223
        %225 = vdwg.mxu0
        %226 = vmatpush.msra.mxu0 0.0
        %227 = vmatpush.msra.mxu0 0.0
        %228 = vmatpush.msra.mxu0 0.0
        %229 = vmatpush.msra.mxu0 0.0
        %230 = vmatpush.msra.mxu0 0.0
        %231 = vmatpush.msra.mxu0 0.0
        %232 = vmatpush.msra.mxu0 0.0
        %233 = vmatpush.msra.mxu0 0.0
        %234 = vmatpush.msra.mxu0 0.0
        %235 = vmatpush.msra.mxu0 0.0
        %236 = vmatpush.msra.mxu0 0.0
        %237 = vmatpush.msra.mxu0 0.0
        %238 = vmatpush.msra.mxu0 0.0
        %239 = vmatpush.msra.mxu0 0.0
        %240 = vmatpush.msra.mxu0 0.0
        %241 = vmatpush.msra.mxu0 %v195
        %242 = vmatmul.f32.gmra.mxu0 %v181
        %v243 = vpop.f32.mrf.mxu0
        %v244 = vadd.f32 0.0, %v243
        %245 = vmatmul.f32.gmra.mxu0 %v184
        %v246 = vpop.f32.mrf.mxu0
        %v247 = vadd.f32 0.0, %v246
        %248 = vmatmul.f32.gmra.mxu0 %v187
        %v249 = vpop.f32.mrf.mxu0
        %v250 = vadd.f32 0.0, %v249
        %251 = vmatmul.f32.gmra.mxu0 %v190
        %v252 = vpop.f32.mrf.mxu0
        %v253 = vadd.f32 0.0, %v252
        %254 = vdwg.mxu0
        %v255 = vmax.f32 %v215, %v244
        %256 = vmax.xlane.f32.xlu0 %v255
        %v257 = vpop.xlane.xlu0 %256
        %v258 = vmax.f32 %v218, %v247
        %259 = vmax.xlane.f32.xlu0 %v258
        %v260 = vpop.xlane.xlu0 %259
        %v261 = vmax.f32 %v221, %v250
        %262 = vmax.xlane.f32.xlu0 %v261
        %v263 = vpop.xlane.xlu0 %262
        %v264 = vmax.f32 %v224, %v253
        %265 = vmax.xlane.f32.xlu0 %v264
        %v266 = vpop.xlane.xlu0 %265
        %v267 = vsub.f32 %v215, %v257
        %v268 = vsub.f32 %v244, %v257
        %v269 = vsub.f32 %v218, %v260
        %v270 = vsub.f32 %v247, %v260
        %v271 = vsub.f32 %v221, %v263
        %v272 = vsub.f32 %v250, %v263
        %v273 = vsub.f32 %v224, %v266
        %v274 = vsub.f32 %v253, %v266
        %v275 = vmul.f32 %v267, 1.442695
        %v276 = vpow.pop %v275
        %v277 = vmul.f32 %v268, 1.442695
        %v278 = vpow.pop %v277
        %v279 = vmul.f32 %v269, 1.442695
        %v280 = vpow.pop %v279
        %v281 = vmul.f32 %v270, 1.442695
        %v282 = vpow.pop %v281
        %v283 = vmul.f32 %v271, 1.442695
        %v284 = vpow.pop %v283
        %v285 = vmul.f32 %v272, 1.442695
        %v286 = vpow.pop %v285
        %v287 = vmul.f32 %v273, 1.442695
        %v288 = vpow.pop %v287
        %v289 = vmul.f32 %v274, 1.442695
        %v290 = vpow.pop %v289
        %v291 = vadd.f32 %v276, %v278
        %292 = vadd.xlane.f32.xlu0 %v291
        %v293 = vpop.xlane.xlu0 %292
        %v294 = vadd.f32 %v280, %v282
        %295 = vadd.xlane.f32.xlu0 %v294
        %v296 = vpop.xlane.xlu0 %295
        %v297 = vadd.f32 %v284, %v286
        %298 = vadd.xlane.f32.xlu0 %v297
        %v299 = vpop.xlane.xlu0 %298
        %v300 = vadd.f32 %v288, %v290
        %301 = vadd.xlane.f32.xlu0 %v300
        %v302 = vpop.xlane.xlu0 %301
        %v303 = vrcp.pop %v293
        %v304 = vrcp.pop %v296
        %v305 = vrcp.pop %v299
        %v306 = vrcp.pop %v302
        %v307 = vmul.f32 %v276, %v303
        %v308 = vmul.f32 %v278, %v303
        %v309 = vmul.f32 %v280, %v304
        %v310 = vmul.f32 %v282, %v304
        %v311 = vmul.f32 %v284, %v305
        %v312 = vmul.f32 %v286, %v305
        %v313 = vmul.f32 %v288, %v306
        %v314 = vmul.f32 %v290, %v306
        %v315 = vadd.f32 %v307, %v309
        %v316 = vadd.f32 %v315, %v311
        %v317 = vadd.f32 %v316, %v313
        %v318 = vrot.slane %v317, 4
        %v319 = vadd.f32 %v317, %v318
        %v320 = vrot.slane %v319, 2
        %v321 = vadd.f32 %v319, %v320
        %v322 = vrot.slane %v321, 1
        %v323 = vadd.f32 %v321, %v322
        %v324 = vadd.f32 %v308, %v310
        %v325 = vadd.f32 %v324, %v312
        %v326 = vadd.f32 %v325, %v314
        %v327 = vrot.slane %v326, 4
        %v328 = vadd.f32 %v326, %v327
        %v329 = vrot.slane %v328, 2
        %v330 = vadd.f32 %v328, %v329
        %v331 = vrot.slane %v330, 1
        %v332 = vadd.f32 %v330, %v331
        %v333 = vadd.f32 %v323, 1e-09
        %v334 = vadd.f32 %v332, 1e-09
        %v335 = vrcp.pop %v333
        %v336 = vmul.f32 %v333, %v335
        %v337 = vsub.f32 1.0, %v336
        %v338 = vmul.f32 %v335, %v337
        %v339 = vadd.f32 %v335, %v338
        %vm340 = vweird.f32 %v333
        %vm341 = vweird.f32 %v335
        %vm342 = vmor %vm340, %vm341
        %v343 = vsel %vm342, %v335, %v339
        %v344 = vand.u32 2147483647, %v333
        %vm345 = vcmp.eq.f32.partialorder %v344, 8.507059e+37
        %v346 = vand.u32 %v333, 2147483648
        %v347 = vor.u32 1.1754944e-38, %v346
        %v348 = vsel %vm345, %v347, %v343
        %v349 = vmul.f32 %v307, %v348
        %v350 = vrcp.pop %v334
        %v351 = vmul.f32 %v334, %v350
        %v352 = vsub.f32 1.0, %v351
        %v353 = vmul.f32 %v350, %v352
        %v354 = vadd.f32 %v350, %v353
        %vm355 = vweird.f32 %v334
        %vm356 = vweird.f32 %v350
        %vm357 = vmor %vm355, %vm356
        %v358 = vsel %vm357, %v350, %v354
        %v359 = vand.u32 2147483647, %v334
        %vm360 = vcmp.eq.f32.partialorder %v359, 8.507059e+37
        %v361 = vand.u32 %v334, 2147483648
        %v362 = vor.u32 1.1754944e-38, %v361
        %v363 = vsel %vm360, %v362, %v358
        %v364 = vmul.f32 %v308, %v363
        %v365 = vmul.f32 %v309, %v348
        %v366 = vmul.f32 %v310, %v363
        %v367 = vmul.f32 %v311, %v348
        %v368 = vmul.f32 %v312, %v363
        %v369 = vmul.f32 %v313, %v348
        %v370 = vmul.f32 %v314, %v363
        %371 = vst [vmem:[#allocation1] ss:$2 sm:$0xff] %v174
        %v372 = vld.sshfl [vmem:[#allocation1] sm:$0xff pattern:$0x75316420]
        %v373 = vld.sshfl [vmem:[#allocation1 + $0x8] sm:$0xff pattern:$0x75316420]
        %vm376 = vcmask 261120
        %v378 = vsel %vm376, %v173, 0
        %380 = vmatpush.msra.mxu0 0.0
        %381 = vmatpush.msra.mxu0 0.0
        %382 = vmatpush.msra.mxu0 0.0
        %383 = vmatpush.msra.mxu0 0.0
        %384 = vmatpush.msra.mxu0 0.0
        %385 = vmatpush.msra.mxu0 0.0
        %386 = vmatpush.msra.mxu0 0.0
        %387 = vmatpush.msra.mxu0 0.0
        %388 = vmatpush.msra.mxu0 0.0
        %389 = vmatpush.msra.mxu0 0.0
        %390 = vmatpush.msra.mxu0 0.0
        %391 = vmatpush.msra.mxu0 0.0
        %392 = vmatpush.msra.mxu0 %v369
        %393 = vmatpush.msra.mxu0 %v367
        %394 = vmatpush.msra.mxu0 %v365
        %395 = vmatpush.msra.mxu0 %v349
        %396 = vmatmul.f32.gmra.mxu0 %v378
        %v397 = vpop.f32.mrf.mxu0
        %v398 = vadd.f32 %v372, %v397
        %399 = vdwg.mxu0
        %400 = vmatpush.msra.mxu0 0.0
        %401 = vmatpush.msra.mxu0 0.0
        %402 = vmatpush.msra.mxu0 0.0
        %403 = vmatpush.msra.mxu0 0.0
        %404 = vmatpush.msra.mxu0 0.0
        %405 = vmatpush.msra.mxu0 0.0
        %406 = vmatpush.msra.mxu0 0.0
        %407 = vmatpush.msra.mxu0 0.0
        %408 = vmatpush.msra.mxu0 0.0
        %409 = vmatpush.msra.mxu0 0.0
        %410 = vmatpush.msra.mxu0 0.0
        %411 = vmatpush.msra.mxu0 0.0
        %412 = vmatpush.msra.mxu0 %v370
        %413 = vmatpush.msra.mxu0 %v368
        %414 = vmatpush.msra.mxu0 %v366
        %415 = vmatpush.msra.mxu0 %v364
        %416 = vmatmul.f32.gmra.mxu0 %v378
        %v417 = vpop.f32.mrf.mxu0
        %v418 = vadd.f32 %v373, %v417
        %419 = vdwg.mxu0
        %v422 = vrot.slane %v418, 4
        %v423 = vsel %vm192, %v398, %v422
        %425 = vst [vmem:[%s163] sm:$0xff] %v423
        %s426 = sand.u32 %s93, 1
        %s427 = scalar_lea.sflag [#allocation3], %s426
        %s428 = sand.u32 %s93, 1
        %s429 = smul.addr %s428, 8
        %s430 = scalar_lea.vmem [#allocation2], %s429
        // Predicated region
        $region33: #{tpu_custom_call.1} parent=31 // pred_check
          %p431 = pneg %p103
        $region34: #{tpu_custom_call.1} parent=31 // pred_check_branch
          %433 = sbr.rel (%p431) target = $region36
        $region35: #{tpu_custom_call.1} parent=31 // pred_region
          %435 = vsyncadd %s427, 0
          %s436 = smul.addr %s17, 2
          %s437 = smul.addr %s436, 4
          %s438 = scalar_lea.hbm %s3, %s437
          %s440 = sshll.u32 %s430, 4
          %s441 = int_to_ptr.vmem [resolvable:$true] %s440
          %s442 = sshll.u32 %s438, 4
          %s443 = int_to_ptr.hbm [resolvable:$true] %s442
          %445 = dma.vmem_to_hbm [thread:$0]  %s441, 128, %s443, %s427
        $region36: #{tpu_custom_call.1} parent=31 // pred_fallthru
          _
      $region32: #{tpu_custom_call.1} parent=5 // pred_fallthru
        _
      %p446 = scmp.le.s32.totalorder 2, %s12
      // Predicated region
      $region37: #{tpu_custom_call.1} parent=5 // pred_check
        %p447 = pneg %p446
      $region38: #{tpu_custom_call.1} parent=5 // pred_check_branch
        %449 = sbr.rel (%p447) target = $region40
      $region39: #{tpu_custom_call.1} parent=5 // pred_region
        %s450 = ssub.s32 %s12, 2
        // Predicated region
        $region41: #{tpu_custom_call.1} parent=39 // pred_check
          %p451 = pneg %p109
        $region42: #{tpu_custom_call.1} parent=39 // pred_check_branch
          %453 = sbr.rel (%p451) target = $region44
        $region43: #{tpu_custom_call.1} parent=39 // pred_region
          %s454 = sand.u32 %s94, 1
          %s455 = scalar_lea.sflag [#allocation3], %s454
          %s456 = sand.u32 %s94, 1
          %s457 = smul.addr %s456, 8
          %s458 = scalar_lea.vmem [#allocation2], %s457
          %460 = dma.done %s455, 128
        $region44: #{tpu_custom_call.1} parent=39 // pred_fallthru
          _
      $region40: #{tpu_custom_call.1} parent=5 // pred_fallthru
        _
    $region6: #{tpu_custom_call.1} parent=1 // loop_footer
      %s16 = sadd.s32 1, %s12
    $region7: #{tpu_custom_call.1} parent=1 // loop_footer_branch
      %11 = sbr.rel target = $region3
    $region8: #{tpu_custom_call.1} parent=1 // loop_exit
      _
    %461 = vsyncpa [#allocation3], 1
    %s462 = scalar_lea.sflag [#allocation3], 1
    %463 = vsyncpa %s462, 1

</llo_original>
